<compile_context>
chip_gen: v7x
topology: tpu7x:2x2x1
jax: 0.10.0
libtpu: 0.0.40
codegen_flags: <defaults>
</compile_context>

<pallas_src>
import functools
import math

import jax
import jax.numpy as jnp
import numpy as np
from jax.experimental import pallas as pl
from jax.experimental.pallas import tpu as pltpu


_ROW_ALIGN = 16     # sublane granularity kept bf16-friendly
_LANE = 128


def _round_up(x, m):
    return (x + m - 1) // m * m


def _cdiv(a, b):
    return -(-a // b)


def _vmem_capacity_bytes():
    try:
        info = pltpu.get_tpu_info()
        cap = getattr(info, "vmem_capacity_bytes", None)
        if cap:
            return int(cap)
    except Exception:
        pass
    return 64 * 2**20     # conservative default (v7x per-TC VMEM)


def _pick_t_tile(t_out, d, c_out, out_itemsize, q_taps, halo, vmem_cap, override):
    """Largest time tile whose per-step live footprint fits the VMEM budget."""
    if override is not None:
        t = int(override)
    else:
        budget = max(6 * 2**20, vmem_cap // 4)       # ~16 MiB on v7x, ~32 MiB on v5e/v6e
        t = 256
        for cand in (2048, 1024, 512, 256):
            est = (2 * cand * d * 2                   # double-buffered bf16 input tile
                   + 2 * halo * d * 2                 # double-buffered halo tile
                   + 2 * cand * c_out * out_itemsize  # double-buffered output tile
                   + q_taps * d * c_out * 2           # resident packed weight
                   + 3 * cand * c_out * 4             # fp32 accumulator / LN temporaries
                   + (cand + halo) * d * 2)           # in-kernel concat copy
            if est <= budget:
                t = cand
                break
    t = min(t, _round_up(t_out, _ROW_ALIGN))
    t = _round_up(t, _ROW_ALIGN)
    if halo:
        t = _round_up(t, halo)
    return t


# ---------------------------------------------------------------------------
# Kernel: Q accumulating MXU dots + bias + fused-stat LayerNorm + erf GELU
# ---------------------------------------------------------------------------
def _conv_ln_gelu_kernel(*refs, q_taps, t_tile, inv_c, eps, has_halo):
    if has_halo:
        x_ref, halo_ref, w_ref, b_ref, g_ref, beta_ref, o_ref = refs
    else:
        x_ref, w_ref, b_ref, g_ref, beta_ref, o_ref = refs

    xw = x_ref[0]                                       # (T_TILE, D) bf16
    if has_halo:
        xw = jnp.concatenate([xw, halo_ref[0]], axis=0)  # (T_TILE + HALO, D)

    # conv as Q accumulating dots (no materialized im2col patch), fp32 accum
    acc = jnp.dot(xw[0:t_tile, :], w_ref[0], preferred_element_type=jnp.float32)
    for q in range(1, q_taps):
        acc = acc + jnp.dot(xw[q:q + t_tile, :], w_ref[q],
                            preferred_element_type=jnp.float32)

    y = acc + b_ref[...]                                 # (T_TILE, C_out) fp32

    # LayerNorm over channels (lane reduction), single-pass fused statistics
    s1 = jnp.sum(y, axis=-1, keepdims=True)
    s2 = jnp.sum(y * y, axis=-1, keepdims=True)
    m = s1 * inv_c
    v = s2 * inv_c - m * m
    y = (y - m) * jax.lax.rsqrt(v + eps) * g_ref[...] + beta_ref[...]

    # exact erf GELU (PyTorch get_activation('gelu'))
    y = 0.5 * y * (1.0 + jax.lax.erf(y * (1.0 / math.sqrt(2.0))))

    o_ref[0] = y.astype(o_ref.dtype)


# ---------------------------------------------------------------------------
# Wrapper: HubertLayerNormConvLayer.forward
# ---------------------------------------------------------------------------
def hubert_layer_norm_conv_forward(x, w, b, gamma, beta, *, stride, eps=1e-5,
                                   compute_dtype=jnp.bfloat16, out_dtype=None,
                                   t_tile=None, time_major_in=False,
                                   time_major_out=False):
    """Forward of HubertLayerNormConvLayer (Conv1d -> LayerNorm(C) -> GELU).

    Default layouts match the PyTorch module: x is (B, C_in, T) and the result
    is (B, C_out, T_out) with T_out = (T - K)//stride + 1.  Set
    time_major_in/out=True (and out_dtype=jnp.bfloat16) when chaining stacked
    conv layers to skip the per-layer HBM transpose / cast round trips.
    `b` may be None (conv_bias=False).
    """
    if time_major_in:
        B, T, C_in = x.shape
    else:
        B, C_in, T = x.shape
    C_out, c_in_w, K = w.shape
    assert c_in_w == C_in
    S = int(stride)
    T_out = (T - K) // S + 1
    assert T_out >= 1, "sequence shorter than the conv kernel"
    if out_dtype is None:
        out_dtype = x.dtype
    if b is None:
        b = jnp.zeros((C_out,), jnp.float32)

    vmem_cap = _vmem_capacity_bytes()

    # ---- layout plumbing (XLA): time-major activations, packed weights ------
    x_tm = x if time_major_in else jnp.transpose(x, (0, 2, 1))   # (B, T, C_in)
    x_tm = x_tm.astype(compute_dtype)
    w_t = jnp.transpose(w, (2, 1, 0))                            # (K, C_in, C_out)

    small_path = (S * C_in) < _LANE
    if small_path:
        # Lane-sparse layers (layer 0 etc.): full im2col in XLA, contraction
        # zero-padded to a lane-dense multiple of 128.  Q collapses to 1.
        Q, halo = 1, 0
        D = _round_up(K * C_in, _LANE)
        t_blk = _pick_t_tile(T_out, D, C_out, jnp.dtype(out_dtype).itemsize,
                             Q, halo, vmem_cap, t_tile)
        NT = _cdiv(T_out, t_blk)
        rows = NT * t_blk
        taps = [x_tm[:, k:k + (T_out - 1) * S + 1:S, :] for k in range(K)]
        patches = jnp.stack(taps, axis=2).reshape(B, T_out, K * C_in)
        x_in = jnp.pad(patches, ((0, 0), (0, rows - T_out), (0, D - K * C_in)))
        wp = jnp.pad(w_t.reshape(K * C_in, C_out),
                     ((0, D - K * C_in), (0, 0))).reshape(1, D, C_out)
    else:
        # Generic path: fold the stride into the lane dim; Q = ceil(K/S)
        # accumulating taps; the Q-1 extra rows per tile come from a tiny
        # Blocked halo spec on the same array.
        Q = _cdiv(K, S)
        Kp = Q * S
        D = S * C_in
        halo = _round_up(Q, _ROW_ALIGN) if Q > 1 else 0
        t_blk = _pick_t_tile(T_out, D, C_out, jnp.dtype(out_dtype).itemsize,
                             Q, halo, vmem_cap, t_tile)
        NT = _cdiv(T_out, t_blk)
        rows = NT * t_blk
        R = rows + halo
        need_t = R * S
        if T < need_t:
            x_tm = jnp.pad(x_tm, ((0, 0), (0, need_t - T), (0, 0)))
        elif T > need_t:
            x_tm = x_tm[:, :need_t, :]
        x_in = x_tm.reshape(B, R, D)
        wp = jnp.pad(w_t, ((0, Kp - K), (0, 0), (0, 0)))
        wp = wp.reshape(Q, S, C_in, C_out).reshape(Q, D, C_out)

    assert Q == 1 or halo > 0
    wp = wp.astype(compute_dtype)
    b2 = jnp.asarray(b, jnp.float32).reshape(1, C_out)
    g2 = jnp.asarray(gamma, jnp.float32).reshape(1, C_out)
    beta2 = jnp.asarray(beta, jnp.float32).reshape(1, C_out)

    has_halo = halo > 0
    kernel = functools.partial(
        _conv_ln_gelu_kernel, q_taps=Q, t_tile=t_blk,
        inv_c=1.0 / float(C_out), eps=float(eps), has_halo=has_halo)

    def _full(a):
        return pl.BlockSpec(a.shape, lambda bi, ti, _a=a: (0,) * _a.ndim)

    in_specs = [pl.BlockSpec((1, t_blk, D), lambda bi, ti: (bi, ti, 0))]
    operands = [x_in]
    if has_halo:
        hb, tb = halo, t_blk
        in_specs.append(pl.BlockSpec(
            (1, hb, D), lambda bi, ti: (bi, (ti + 1) * (tb // hb), 0)))
        operands.append(x_in)            # same array, tiny shifted halo window
    in_specs += [_full(wp), _full(b2), _full(g2), _full(beta2)]
    operands += [wp, b2, g2, beta2]

    # Scoped VMEM limit from the device (48 MiB on v7x, ~96 MiB on v5e/v6e).
    vmem_limit = int(min(max(32 * 2**20, vmem_cap * 3 // 4), 100 * 2**20))

    out = pl.pallas_call(
        kernel,
        out_shape=jax.ShapeDtypeStruct((B, rows, C_out), out_dtype),
        grid=(B, NT),
        in_specs=in_specs,
        out_specs=pl.BlockSpec((1, t_blk, C_out), lambda bi, ti: (bi, ti, 0)),
        compiler_params=pltpu.CompilerParams(
            dimension_semantics=("parallel", "parallel"),
            vmem_limit_bytes=vmem_limit,
        ),
    )(*operands)

    out = out[:, :T_out, :]
    if not time_major_out:
        out = jnp.transpose(out, (0, 2, 1))   # back to (B, C_out, T_out)
    return out


# ---------------------------------------------------------------------------
# Independent pure-JAX reference (XLA conv), same bf16-operand / fp32-accum regime
# ---------------------------------------------------------------------------
def _reference_forward(x_ncl, w, b, gamma, beta, *, stride, eps=1e-5,
                       compute_dtype=jnp.bfloat16):
    y = jax.lax.conv_general_dilated(
        x_ncl.astype(compute_dtype), w.astype(compute_dtype),
        window_strides=(int(stride),), padding=[(0, 0)],
        dimension_numbers=("NCH", "OIH", "NCH"),
        preferred_element_type=jnp.float32)
    y = y + b.astype(jnp.float32)[None, :, None]
    yt = jnp.transpose(y, (0, 2, 1))
    m = jnp.mean(yt, axis=-1, keepdims=True)
    v = jnp.mean(jnp.square(yt - m), axis=-1, keepdims=True)
    yt = (yt - m) * jax.lax.rsqrt(v + eps) * gamma + beta
    y = jnp.transpose(yt, (0, 2, 1))
    y = 0.5 * y * (1.0 + jax.lax.erf(y * (1.0 / math.sqrt(2.0))))
    return y.astype(x_ncl.dtype)


if __name__ == "__main__":
    key = jax.random.PRNGKey(0)
    k0, k1, k2, kx, kx2 = jax.random.split(key, 5)
    eps = 1e-5  # nn.LayerNorm default (module does not pass config.layer_norm_eps)

    def init_layer(k, c_in, c_out, ksz):
        kw, kb, kg, kbt = jax.random.split(k, 4)
        scale = 1.0 / math.sqrt(c_in * ksz)
        return dict(
            w=scale * jax.random.normal(kw, (c_out, c_in, ksz), jnp.float32),
            b=0.1 * jax.random.normal(kb, (c_out,), jnp.float32),
            gamma=1.0 + 0.05 * jax.random.normal(kg, (c_out,), jnp.float32),
            beta=0.05 * jax.random.normal(kbt, (c_out,), jnp.float32),
        )

    def check(out, ref, name):
        np.testing.assert_allclose(np.asarray(out), np.asarray(ref),
                                   atol=2e-3, rtol=2e-3, err_msg=name)

    # toy HubertConfig slice: conv_dim=(8, 32), conv_kernel=(10, 3), conv_stride=(5, 2)
    B, T = 2, 80
    layer0 = init_layer(k0, 1, 8, 10)     # layer_id = 0 -> in_conv_dim = 1
    layer1 = init_layer(k1, 8, 32, 3)     # layer_id = 1 -> in_conv_dim = conv_dim[0]
    x = jax.random.normal(kx, (B, 1, T), jnp.float32)

    out0 = jax.block_until_ready(hubert_layer_norm_conv_forward(
        x, layer0["w"], layer0["b"], layer0["gamma"], layer0["beta"],
        stride=5, eps=eps))
    check(out0, _reference_forward(x, layer0["w"], layer0["b"], layer0["gamma"],
                                   layer0["beta"], stride=5, eps=eps), "layer0")

    out1 = jax.block_until_ready(hubert_layer_norm_conv_forward(
        out0, layer1["w"], layer1["b"], layer1["gamma"], layer1["beta"],
        stride=2, eps=eps))
    check(out1, _reference_forward(out0, layer1["w"], layer1["b"], layer1["gamma"],
                                   layer1["beta"], stride=2, eps=eps), "layer1")

    # Exercise the generic stride-folded path (lane-dense channels, Q=2 halo
    # across several time tiles): C_in=64, C_out=128, K=3, S=2, forced 16-row tiles.
    layer2 = init_layer(k2, 64, 128, 3)
    x2 = jax.random.normal(kx2, (2, 64, 81), jnp.float32)
    out2 = jax.block_until_ready(hubert_layer_norm_conv_forward(
        x2, layer2["w"], layer2["b"], layer2["gamma"], layer2["beta"],
        stride=2, eps=eps, t_tile=16))
    check(out2, _reference_forward(x2, layer2["w"], layer2["b"], layer2["gamma"],
                                   layer2["beta"], stride=2, eps=eps), "layer2")

    print("KERNEL_OK")
</pallas_src>

<mosaic_0001>
module attributes {stable_mosaic.version = 11 : i64} {
  func.func @_conv_ln_gelu_kernel(%arg0: i32, %arg1: i32, %arg2: memref<1x16x128xbf16, #tpu.memory_space<vmem>>, %arg3: memref<1x128x8xbf16, #tpu.memory_space<vmem>>, %arg4: memref<1x8xf32, #tpu.memory_space<vmem>>, %arg5: memref<1x8xf32, #tpu.memory_space<vmem>>, %arg6: memref<1x8xf32, #tpu.memory_space<vmem>>, %arg7: memref<1x16x8xf32, #tpu.memory_space<vmem>>) attributes {dimension_semantics = [#tpu.dimension_semantics<parallel>, #tpu.dimension_semantics<parallel>], iteration_bounds = array<i64: 2, 1>, scalar_prefetch = 0 : i64, scratch_operands = 0 : i64, tpu.core_type = #tpu.core_type<tc>, window_params = [{transform_indices = @transform_0, window_bounds = array<i64: 1, 16, 128>}, {pipeline_mode = #tpu.pipeline_mode<synchronous>, transform_indices = @transform_1, window_bounds = array<i64: 1, 128, 8>}, {pipeline_mode = #tpu.pipeline_mode<synchronous>, transform_indices = @transform_2, window_bounds = array<i64: 1, 8>}, {pipeline_mode = #tpu.pipeline_mode<synchronous>, transform_indices = @transform_3, window_bounds = array<i64: 1, 8>}, {pipeline_mode = #tpu.pipeline_mode<synchronous>, transform_indices = @transform_4, window_bounds = array<i64: 1, 8>}, {transform_indices = @transform_5, window_bounds = array<i64: 1, 16, 8>}]} {
    %c0 = arith.constant 0 : index
    %c0_0 = arith.constant 0 : index
    %c0_1 = arith.constant 0 : index
    %0 = vector.load %arg2[%c0, %c0_0, %c0_1] : memref<1x16x128xbf16, #tpu.memory_space<vmem>>, vector<1x16x128xbf16>
    %1 = vector.shape_cast %0 : vector<1x16x128xbf16> to vector<16x128xbf16>
    %c0_2 = arith.constant 0 : index
    %c0_3 = arith.constant 0 : index
    %c0_4 = arith.constant 0 : index
    %2 = vector.load %arg3[%c0_2, %c0_3, %c0_4] : memref<1x128x8xbf16, #tpu.memory_space<vmem>>, vector<1x128x8xbf16>
    %3 = vector.shape_cast %2 : vector<1x128x8xbf16> to vector<128x8xbf16>
    %cst = arith.constant dense<0.000000e+00> : vector<16x8xf32>
    %4 = tpu.matmul %1, %3, %cst {dimension_numbers = #tpu.dot_dimension_numbers<[1], [0], [0], [1], [0, 0, 1, 1], [], []>} : vector<16x128xbf16>, vector<128x8xbf16>, vector<16x8xf32> -> vector<16x8xf32>
    %c0_5 = arith.constant 0 : index
    %c0_6 = arith.constant 0 : index
    %5 = vector.load %arg4[%c0_5, %c0_6] : memref<1x8xf32, #tpu.memory_space<vmem>>, vector<1x8xf32>
    %6 = vector.broadcast %5 : vector<1x8xf32> to vector<16x8xf32>
    %7 = arith.addf %4, %6 : vector<16x8xf32>
    %cst_7 = arith.constant dense<0.000000e+00> : vector<16xf32>
    %8 = vector.multi_reduction <add>, %7, %cst_7 [1] : vector<16x8xf32> to vector<16xf32>
    %9 = vector.shape_cast %8 : vector<16xf32> to vector<16x1xf32>
    %10 = arith.mulf %7, %7 : vector<16x8xf32>
    %cst_8 = arith.constant dense<0.000000e+00> : vector<16xf32>
    %11 = vector.multi_reduction <add>, %10, %cst_8 [1] : vector<16x8xf32> to vector<16xf32>
    %12 = vector.shape_cast %11 : vector<16xf32> to vector<16x1xf32>
    %cst_9 = arith.constant 1.250000e-01 : f32
    %13 = vector.broadcast %cst_9 : f32 to vector<16x1xf32>
    %14 = arith.mulf %9, %13 : vector<16x1xf32>
    %cst_10 = arith.constant 1.250000e-01 : f32
    %15 = vector.broadcast %cst_10 : f32 to vector<16x1xf32>
    %16 = arith.mulf %12, %15 : vector<16x1xf32>
    %17 = arith.mulf %14, %14 : vector<16x1xf32>
    %18 = arith.subf %16, %17 : vector<16x1xf32>
    %19 = vector.broadcast %14 : vector<16x1xf32> to vector<16x8xf32>
    %20 = arith.subf %7, %19 : vector<16x8xf32>
    %cst_11 = arith.constant 9.99999974E-6 : f32
    %21 = vector.broadcast %cst_11 : f32 to vector<16x1xf32>
    %22 = arith.addf %18, %21 : vector<16x1xf32>
    %23 = math.rsqrt %22 : vector<16x1xf32>
    %24 = vector.broadcast %23 : vector<16x1xf32> to vector<16x8xf32>
    %25 = arith.mulf %20, %24 : vector<16x8xf32>
    %c0_12 = arith.constant 0 : index
    %c0_13 = arith.constant 0 : index
    %26 = vector.load %arg5[%c0_12, %c0_13] : memref<1x8xf32, #tpu.memory_space<vmem>>, vector<1x8xf32>
    %27 = vector.broadcast %26 : vector<1x8xf32> to vector<16x8xf32>
    %28 = arith.mulf %25, %27 : vector<16x8xf32>
    %c0_14 = arith.constant 0 : index
    %c0_15 = arith.constant 0 : index
    %29 = vector.load %arg6[%c0_14, %c0_15] : memref<1x8xf32, #tpu.memory_space<vmem>>, vector<1x8xf32>
    %30 = vector.broadcast %29 : vector<1x8xf32> to vector<16x8xf32>
    %31 = arith.addf %28, %30 : vector<16x8xf32>
    %cst_16 = arith.constant 5.000000e-01 : f32
    %32 = vector.broadcast %cst_16 : f32 to vector<16x8xf32>
    %33 = arith.mulf %32, %31 : vector<16x8xf32>
    %cst_17 = arith.constant 0.707106769 : f32
    %34 = vector.broadcast %cst_17 : f32 to vector<16x8xf32>
    %35 = arith.mulf %31, %34 : vector<16x8xf32>
    %36 = math.erf %35 : vector<16x8xf32>
    %cst_18 = arith.constant 1.000000e+00 : f32
    %37 = vector.broadcast %cst_18 : f32 to vector<16x8xf32>
    %38 = arith.addf %37, %36 : vector<16x8xf32>
    %39 = arith.mulf %33, %38 : vector<16x8xf32>
    %c0_19 = arith.constant 0 : index
    %c0_20 = arith.constant 0 : index
    %c0_21 = arith.constant 0 : index
    %40 = vector.load %arg7[%c0_19, %c0_20, %c0_21] : memref<1x16x8xf32, #tpu.memory_space<vmem>>, vector<1x16x8xf32>
    %41 = vector.shape_cast %40 : vector<1x16x8xf32> to vector<16x8xf32>
    %42 = vector.shape_cast %39 : vector<16x8xf32> to vector<1x16x8xf32>
    tpu.vector_store %arg7[%c0_19, %c0_20, %c0_21], %42 {strides = array<i32>} : memref<1x16x8xf32, #tpu.memory_space<vmem>>, vector<1x16x8xf32>,
    return
  }
  func.func @transform_0(%arg0: i32, %arg1: i32) -> (i32, i32, i32) {
    %c0_i32 = arith.constant 0 : i32
    %c0_i32_0 = arith.constant 0 : i32
    return %arg0, %arg1, %c0_i32 : i32, i32, i32
  }
  func.func @transform_1(%arg0: i32, %arg1: i32) -> (i32, i32, i32) {
    %c0_i32 = arith.constant 0 : i32
    %c0_i32_0 = arith.constant 0 : i32
    %c0_i32_1 = arith.constant 0 : i32
    %c0_i32_2 = arith.constant 0 : i32
    return %c0_i32, %c0_i32_0, %c0_i32_1 : i32, i32, i32
  }
  func.func @transform_2(%arg0: i32, %arg1: i32) -> (i32, i32) {
    %c0_i32 = arith.constant 0 : i32
    %c0_i32_0 = arith.constant 0 : i32
    %c0_i32_1 = arith.constant 0 : i32
    return %c0_i32, %c0_i32_0 : i32, i32
  }
  func.func @transform_3(%arg0: i32, %arg1: i32) -> (i32, i32) {
    %c0_i32 = arith.constant 0 : i32
    %c0_i32_0 = arith.constant 0 : i32
    %c0_i32_1 = arith.constant 0 : i32
    return %c0_i32, %c0_i32_0 : i32, i32
  }
  func.func @transform_4(%arg0: i32, %arg1: i32) -> (i32, i32) {
    %c0_i32 = arith.constant 0 : i32
    %c0_i32_0 = arith.constant 0 : i32
    %c0_i32_1 = arith.constant 0 : i32
    return %c0_i32, %c0_i32_0 : i32, i32
  }
  func.func @transform_5(%arg0: i32, %arg1: i32) -> (i32, i32, i32) {
    %c0_i32 = arith.constant 0 : i32
    %c0_i32_0 = arith.constant 0 : i32
    return %arg0, %arg1, %c0_i32 : i32, i32, i32
  }
}

</mosaic_0001>

<llo_original>
// kernel: tpu_custom_call.1
$region0: #{tpu_custom_call.1}
  #allocation0 [shape = 'u32[]', space=smem, size = 0x4, offset = 0x4, fixed_abs, tag = 'smem constant byte address 0x4 - core index']
  #allocation1 [shape = 'u32[144,128]{1,0:T(1,128)}', space=vmem, size = 0x12000, scoped, tag = 'internal scratch']
  %s0 = inlined_call_operand.vmem [shape: bf16[2,16,128], index: 0, kind: input, shape index: {}]
  %s1 = inlined_call_operand.vmem [shape: bf16[1,128,8], index: 1, kind: input, shape index: {}]
  %s2 = inlined_call_operand.vmem [shape: f32[1,8], index: 2, kind: input, shape index: {}]
  %s3 = inlined_call_operand.vmem [shape: f32[1,8], index: 3, kind: input, shape index: {}]
  %s4 = inlined_call_operand.vmem [shape: f32[1,8], index: 4, kind: input, shape index: {}]
  %s5 = inlined_call_operand.vmem [shape: f32[2,16,8], index: 5, kind: output, shape index: {}]
  %s6 = sld [smem:[#allocation0]]
  $region53: #{tpu_custom_call.1} parent=0
    _
  %s8 = ssub.s32 1, %s6
  %s9 = scalar_select 0, %s8, %s6
  loop: start=0, step=1, limit=4
  $region2: #{tpu_custom_call.1} parent=0 // loop_pre_header
    _
  $region3: #{tpu_custom_call.1} parent=0 // loop_header
    %s11 = sphi 0, %s15
    %p12 = scmp.ge.s32.totalorder %s11, 4
    %s18 = sphi 0, %s30
    %s19 = sphi 0, %s26
    %s20 = sphi 0, %s18
    %s21 = sphi 0, %s19
    %s22 = sphi 0, %s20
    %s23 = sphi 0, %s21
    %s35 = sphi 0, %s37
    %s38 = sphi 0, %s35
    %s39 = sphi 0, %s38
    %s55 = sphi 0, %s39
    %s59 = sphi 0, %s59
    %s61 = sphi 0, %s59
    %s62 = sphi 0, %s61
    %s76 = sphi 0, %s62
    %s80 = sphi 0, %s80
    %s82 = sphi 0, %s80
    %s83 = sphi 0, %s82
    %s97 = sphi 0, %s83
    %s101 = sphi 0, %s101
    %s103 = sphi 0, %s101
    %s104 = sphi 0, %s103
    %s118 = sphi 0, %s104
    %s122 = sphi 0, %s122
    %s124 = sphi 0, %s122
    %s125 = sphi 0, %s124
    %s139 = sphi 0, %s125
    %s147 = sphi 0, %s149
    %s150 = sphi 0, %s147
    %s151 = sphi 0, %s150
    %s167 = sphi 0, %s151
  $region4: #{tpu_custom_call.1} parent=0 // loop_header_branch
    %14 = sbr.rel (%p12) target = $region8
  $region5: #{tpu_custom_call.1} parent=0 // loop_body
    %s16 = ssub.s32 %s11, 1
    %s17 = ssub.s32 %s11, 2
    %s24 = sadd.s32 1, %s19
    %p25 = scmp.ge.s32.totalorder %s24, 1
    %s26 = scalar_select %p25, 0, %s24
    %s27 = sadd.s32 1, %s18
    %s28 = scalar_select %p25, %s27, %s18
    %p29 = scmp.ge.s32.totalorder %s28, 2
    %s30 = scalar_select %p29, 0, %s28
    %s31 = ssub.s32 %s18, %s30
    %s32 = ssub.s32 %s19, %s26
    %s33 = sor.u32 %s31, %s32
    %p34 = scmp.eq.s32.totalorder %s33, 0
    %s36 = sadd.s32 %s35, 1
    %s37 = scalar_select %p34, %s35, %s36
    %p40 = pneg %p34
    %p41 = scmp.eq.s32.totalorder %s11, 1
    %p42 = por %p40, %p41
    %p43 = scmp.ne.s32.totalorder %s35, %s38
    %p44 = scmp.eq.s32.totalorder %s11, 0
    %p45 = por %p43, %p44
    %p46 = scmp.ne.s32.totalorder %s35, %s38
    %p47 = scmp.eq.s32.totalorder %s16, 1
    %p48 = por %p46, %p47
    %p49 = scmp.ne.s32.totalorder %s38, %s39
    %p50 = scmp.eq.s32.totalorder %s16, 0
    %p51 = por %p49, %p50
    %p52 = scmp.ne.s32.totalorder %s38, %s39
    %p53 = scmp.eq.s32.totalorder %s17, 1
    %p54 = por %p52, %p53
    %p56 = scmp.ne.s32.totalorder %s39, %s55
    %p57 = scmp.eq.s32.totalorder %s17, 0
    %p58 = por %p56, %p57
    %s60 = sadd.s32 %s59, 1
    %p63 = scmp.eq.s32.totalorder %s11, 1
    %p64 = scmp.ne.s32.totalorder %s59, %s61
    %p65 = scmp.eq.s32.totalorder %s11, 0
    %p66 = por %p64, %p65
    %p67 = scmp.ne.s32.totalorder %s59, %s61
    %p68 = scmp.eq.s32.totalorder %s16, 1
    %p69 = por %p67, %p68
    %p70 = scmp.ne.s32.totalorder %s61, %s62
    %p71 = scmp.eq.s32.totalorder %s16, 0
    %p72 = por %p70, %p71
    %p73 = scmp.ne.s32.totalorder %s61, %s62
    %p74 = scmp.eq.s32.totalorder %s17, 1
    %p75 = por %p73, %p74
    %p77 = scmp.ne.s32.totalorder %s62, %s76
    %p78 = scmp.eq.s32.totalorder %s17, 0
    %p79 = por %p77, %p78
    %s81 = sadd.s32 %s80, 1
    %p84 = scmp.eq.s32.totalorder %s11, 1
    %p85 = scmp.ne.s32.totalorder %s80, %s82
    %p86 = scmp.eq.s32.totalorder %s11, 0
    %p87 = por %p85, %p86
    %p88 = scmp.ne.s32.totalorder %s80, %s82
    %p89 = scmp.eq.s32.totalorder %s16, 1
    %p90 = por %p88, %p89
    %p91 = scmp.ne.s32.totalorder %s82, %s83
    %p92 = scmp.eq.s32.totalorder %s16, 0
    %p93 = por %p91, %p92
    %p94 = scmp.ne.s32.totalorder %s82, %s83
    %p95 = scmp.eq.s32.totalorder %s17, 1
    %p96 = por %p94, %p95
    %p98 = scmp.ne.s32.totalorder %s83, %s97
    %p99 = scmp.eq.s32.totalorder %s17, 0
    %p100 = por %p98, %p99
    %s102 = sadd.s32 %s101, 1
    %p105 = scmp.eq.s32.totalorder %s11, 1
    %p106 = scmp.ne.s32.totalorder %s101, %s103
    %p107 = scmp.eq.s32.totalorder %s11, 0
    %p108 = por %p106, %p107
    %p109 = scmp.ne.s32.totalorder %s101, %s103
    %p110 = scmp.eq.s32.totalorder %s16, 1
    %p111 = por %p109, %p110
    %p112 = scmp.ne.s32.totalorder %s103, %s104
    %p113 = scmp.eq.s32.totalorder %s16, 0
    %p114 = por %p112, %p113
    %p115 = scmp.ne.s32.totalorder %s103, %s104
    %p116 = scmp.eq.s32.totalorder %s17, 1
    %p117 = por %p115, %p116
    %p119 = scmp.ne.s32.totalorder %s104, %s118
    %p120 = scmp.eq.s32.totalorder %s17, 0
    %p121 = por %p119, %p120
    %s123 = sadd.s32 %s122, 1
    %p126 = scmp.eq.s32.totalorder %s11, 1
    %p127 = scmp.ne.s32.totalorder %s122, %s124
    %p128 = scmp.eq.s32.totalorder %s11, 0
    %p129 = por %p127, %p128
    %p130 = scmp.ne.s32.totalorder %s122, %s124
    %p131 = scmp.eq.s32.totalorder %s16, 1
    %p132 = por %p130, %p131
    %p133 = scmp.ne.s32.totalorder %s124, %s125
    %p134 = scmp.eq.s32.totalorder %s16, 0
    %p135 = por %p133, %p134
    %p136 = scmp.ne.s32.totalorder %s124, %s125
    %p137 = scmp.eq.s32.totalorder %s17, 1
    %p138 = por %p136, %p137
    %p140 = scmp.ne.s32.totalorder %s125, %s139
    %p141 = scmp.eq.s32.totalorder %s17, 0
    %p142 = por %p140, %p141
    %s143 = ssub.s32 %s18, %s30
    %s144 = ssub.s32 %s19, %s26
    %s145 = sor.u32 %s143, %s144
    %p146 = scmp.eq.s32.totalorder %s145, 0
    %s148 = sadd.s32 %s147, 1
    %s149 = scalar_select %p146, %s147, %s148
    %p152 = pneg %p146
    %p153 = scmp.eq.s32.totalorder %s11, 1
    %p154 = por %p152, %p153
    %p155 = scmp.ne.s32.totalorder %s147, %s150
    %p156 = scmp.eq.s32.totalorder %s11, 0
    %p157 = por %p155, %p156
    %p158 = scmp.ne.s32.totalorder %s147, %s150
    %p159 = scmp.eq.s32.totalorder %s16, 1
    %p160 = por %p158, %p159
    %p161 = scmp.ne.s32.totalorder %s150, %s151
    %p162 = scmp.eq.s32.totalorder %s16, 0
    %p163 = por %p161, %p162
    %p164 = scmp.ne.s32.totalorder %s150, %s151
    %p165 = scmp.eq.s32.totalorder %s17, 1
    %p166 = por %p164, %p165
    %p168 = scmp.ne.s32.totalorder %s151, %s167
    %p169 = scmp.eq.s32.totalorder %s17, 0
    %p170 = por %p168, %p169
    %p171 = scmp.le.s32.totalorder 1, %s11
    %p172 = scmp.lt.s32.totalorder %s11, 3
    %p173 = pnand %p171, %p172
    %p174 = pneg %p173
    // Predicated region
    $region9: #{tpu_custom_call.1} parent=5 // pred_check
      _
    $region10: #{tpu_custom_call.1} parent=5 // pred_check_branch
      %176 = sbr.rel (%p173) target = $region12
    $region11: #{tpu_custom_call.1} parent=5 // pred_region
      %s177 = ssub.s32 %s11, 1
      // Predicated region
      $region13: #{tpu_custom_call.1} parent=11 // pred_check
        %p178 = pneg %p72
      $region14: #{tpu_custom_call.1} parent=11 // pred_check_branch
        %180 = sbr.rel (%p178) target = $region16
      $region15: #{tpu_custom_call.1} parent=11 // pred_region
        _
      $region16: #{tpu_custom_call.1} parent=11 // pred_fallthru
        _
      // Predicated region
      $region17: #{tpu_custom_call.1} parent=11 // pred_check
        %p181 = pneg %p93
      $region18: #{tpu_custom_call.1} parent=11 // pred_check_branch
        %183 = sbr.rel (%p181) target = $region20
      $region19: #{tpu_custom_call.1} parent=11 // pred_region
        _
      $region20: #{tpu_custom_call.1} parent=11 // pred_fallthru
        _
      // Predicated region
      $region21: #{tpu_custom_call.1} parent=11 // pred_check
        %p184 = pneg %p114
      $region22: #{tpu_custom_call.1} parent=11 // pred_check_branch
        %186 = sbr.rel (%p184) target = $region24
      $region23: #{tpu_custom_call.1} parent=11 // pred_region
        _
      $region24: #{tpu_custom_call.1} parent=11 // pred_fallthru
        _
      // Predicated region
      $region25: #{tpu_custom_call.1} parent=11 // pred_check
        %p187 = pneg %p135
      $region26: #{tpu_custom_call.1} parent=11 // pred_check_branch
        %189 = sbr.rel (%p187) target = $region28
      $region27: #{tpu_custom_call.1} parent=11 // pred_region
        _
      $region28: #{tpu_custom_call.1} parent=11 // pred_fallthru
        _
    $region12: #{tpu_custom_call.1} parent=5 // pred_fallthru
      _
    %p190 = scmp.lt.s32.totalorder %s11, 2
    // Predicated region
    $region29: #{tpu_custom_call.1} parent=5 // pred_check
      %p191 = pneg %p190
    $region30: #{tpu_custom_call.1} parent=5 // pred_check_branch
      %193 = sbr.rel (%p191) target = $region32
    $region31: #{tpu_custom_call.1} parent=5 // pred_region
      // Predicated region
      $region33: #{tpu_custom_call.1} parent=31 // pred_check
        %p194 = pneg %p45
      $region34: #{tpu_custom_call.1} parent=31 // pred_check_branch
        %196 = sbr.rel (%p194) target = $region36
      $region35: #{tpu_custom_call.1} parent=31 // pred_region
        %s197 = smul.u32 2, %s19
        %p198 = scmp.lt.s32.totalorder %s18, 1
        %s199 = scalar_select %p198, %s18, 1
        %p200 = scmp.lt.s32.totalorder %s197, 1
        %s201 = scalar_select %p200, %s197, 1
        %s202 = smul.addr %s199, 2
        %s203 = sadd.s32 %s201, %s202
        %s204 = smul.addr %s203, 4
        %s205 = scalar_lea.vmem %s0, %s204
        %s206 = smul.u32 2, %s19
      $region36: #{tpu_custom_call.1} parent=31 // pred_fallthru
        _
    $region32: #{tpu_custom_call.1} parent=5 // pred_fallthru
      _
    %p207 = scmp.le.s32.totalorder 1, %s11
    %p208 = scmp.lt.s32.totalorder %s11, 3
    %p209 = pnand %p207, %p208
    %p210 = pneg %p209
    // Predicated region
    $region37: #{tpu_custom_call.1} parent=5 // pred_check
      _
    $region38: #{tpu_custom_call.1} parent=5 // pred_check_branch
      %212 = sbr.rel (%p209) target = $region40
    $region39: #{tpu_custom_call.1} parent=5 // pred_region
      %s213 = ssub.s32 %s11, 1
      %s214 = smul.u32 2, %s21
      %p215 = scmp.lt.s32.totalorder %s20, 1
      %s216 = scalar_select %p215, %s20, 1
      %p217 = scmp.lt.s32.totalorder %s214, 1
      %s218 = scalar_select %p217, %s214, 1
      %s219 = smul.addr %s216, 2
      %s220 = sadd.s32 %s218, %s219
      %s221 = smul.addr %s220, 4
      %s222 = scalar_lea.vmem %s0, %s221
      %p223 = pneg %p51
      %p224 = pneg %p48
      %p225 = pneg %p72
      %p226 = pneg %p69
      %p227 = pneg %p93
      %p228 = pneg %p90
      %p229 = pneg %p114
      %p230 = pneg %p111
      %p231 = pneg %p135
      %p232 = pneg %p132
      %p233 = pneg %p163
      %p234 = pneg %p160
      %s235 = smul.u32 2, %s21
      %p236 = scmp.lt.s32.totalorder %s20, 1
      %s237 = scalar_select %p236, %s20, 1
      %p238 = scmp.lt.s32.totalorder %s235, 1
      %s239 = scalar_select %p238, %s235, 1
      %s240 = smul.addr %s237, 2
      %s241 = sadd.s32 %s239, %s240
      %s242 = smul.addr %s241, 8
      %s243 = scalar_lea.vmem %s5, %s242
      %s244 = smul.u32 2, %s21
      %p245 = scmp.lt.s32.totalorder %s20, 1
      %s246 = scalar_select %p245, %s20, 1
      %p247 = scmp.lt.s32.totalorder %s244, 1
      %s248 = scalar_select %p247, %s244, 1
      %s249 = smul.addr %s246, 2
      %s250 = sadd.s32 %s248, %s249
      %s251 = smul.addr %s250, 4
      %s252 = scalar_lea.vmem %s0, %s251
      %s253 = smul.u32 2, %s21
      %s254 = smul.u32 2, %s21
      %p255 = scmp.lt.s32.totalorder %s20, 1
      %s256 = scalar_select %p255, %s20, 1
      %p257 = scmp.lt.s32.totalorder %s254, 1
      %s258 = scalar_select %p257, %s254, 1
      %s259 = smul.addr %s256, 2
      %s260 = sadd.s32 %s258, %s259
      %s261 = smul.addr %s260, 8
      %s262 = scalar_lea.vmem %s5, %s261
      %s263 = smul.u32 2, %s21
      %v265 = vld [vmem:[%s252] sm:$0xf]
      %v266 = vld [vmem:[%s252 + $0x4] sm:$0xf]
      %v267 = vld [vmem:[%s1] sm:$0xf]
      %v268 = vld [vmem:[%s1 + $0x4] sm:$0xf]
      %v269 = vld [vmem:[%s1 + $0x8] sm:$0xf]
      %v270 = vld [vmem:[%s1 + $0xc] sm:$0xf]
      %v271 = vld [vmem:[%s1 + $0x10] sm:$0xf]
      %v272 = vld [vmem:[%s1 + $0x14] sm:$0xf]
      %v273 = vld [vmem:[%s1 + $0x18] sm:$0xf]
      %v274 = vld [vmem:[%s1 + $0x1c] sm:$0xf]
      %v275 = vld [vmem:[%s1 + $0x20] sm:$0xf]
      %v276 = vld [vmem:[%s1 + $0x24] sm:$0xf]
      %v277 = vld [vmem:[%s1 + $0x28] sm:$0xf]
      %v278 = vld [vmem:[%s1 + $0x2c] sm:$0xf]
      %v279 = vld [vmem:[%s1 + $0x30] sm:$0xf]
      %v280 = vld [vmem:[%s1 + $0x34] sm:$0xf]
      %v281 = vld [vmem:[%s1 + $0x38] sm:$0xf]
      %v282 = vld [vmem:[%s1 + $0x3c] sm:$0xf]
      %v283 = vld [vmem:[%s2] sm:$0x1]
      %v285 = vlaneseq
      %v286 = vshrl.u32 %v285, 7
      %v287 = vsub.s32 0, %v286
      %v288 = vrot.slane %v283, %v287
      %v292 = vunpack.c.l.b16 %v265
      %v293 = vunpack.c.l.b16 %v266
      %v294 = vpack.c.b16 %v293, %v292
      %v312 = vunpack.c.l.b16 %v267
      %v313 = vunpack.c.l.b16 %v268
      %v314 = vunpack.c.l.b16 %v269
      %v315 = vunpack.c.l.b16 %v270
      %v316 = vunpack.c.l.b16 %v271
      %v317 = vunpack.c.l.b16 %v272
      %v318 = vunpack.c.l.b16 %v273
      %v319 = vunpack.c.l.b16 %v274
      %v320 = vunpack.c.l.b16 %v275
      %v321 = vunpack.c.l.b16 %v276
      %v322 = vunpack.c.l.b16 %v277
      %v323 = vunpack.c.l.b16 %v278
      %v324 = vunpack.c.l.b16 %v279
      %v325 = vunpack.c.l.b16 %v280
      %v326 = vunpack.c.l.b16 %v281
      %v327 = vunpack.c.l.b16 %v282
      %v328 = vpack.c.b16 %v313, %v312
      %v329 = vpack.c.b16 %v315, %v314
      %v330 = vpack.c.b16 %v317, %v316
      %v331 = vpack.c.b16 %v319, %v318
      %v332 = vpack.c.b16 %v321, %v320
      %v333 = vpack.c.b16 %v323, %v322
      %v334 = vpack.c.b16 %v325, %v324
      %v335 = vpack.c.b16 %v327, %v326
      %344 = vmatprep.subr.bf16.mxu0 0
      %345 = vmatpush1.bf16.msra.mxu0 %v328
      %346 = vmatprep.subr.bf16.mxu0 0
      %347 = vmatpush1.bf16.msra.mxu0 %v329
      %348 = vmatprep.subr.bf16.mxu0 0
      %349 = vmatpush1.bf16.msra.mxu0 %v330
      %350 = vmatprep.subr.bf16.mxu0 0
      %351 = vmatpush1.bf16.msra.mxu0 %v331
      %352 = vmatprep.subr.bf16.mxu0 0
      %353 = vmatpush1.bf16.msra.mxu0 %v332
      %354 = vmatprep.subr.bf16.mxu0 0
      %355 = vmatpush1.bf16.msra.mxu0 %v333
      %356 = vmatprep.subr.bf16.mxu0 0
      %357 = vmatpush1.bf16.msra.mxu0 %v334
      %358 = vmatprep.subr.bf16.mxu0 0
      %359 = vmatpush1.bf16.msra.mxu0 %v335
      %360 = vmatprep.subr.bf16.mxu0 0
      %361 = vmatpush1.bf16.msra.mxu0 0
      %362 = vmatprep.subr.bf16.mxu0 0
      %363 = vmatpush1.bf16.msra.mxu0 0
      %364 = vmatprep.subr.bf16.mxu0 0
      %365 = vmatpush1.bf16.msra.mxu0 0
      %366 = vmatprep.subr.bf16.mxu0 0
      %367 = vmatpush1.bf16.msra.mxu0 0
      %368 = vmatprep.subr.bf16.mxu0 0
      %369 = vmatpush1.bf16.msra.mxu0 0
      %370 = vmatprep.subr.bf16.mxu0 0
      %371 = vmatpush1.bf16.msra.mxu0 0
      %372 = vmatprep.subr.bf16.mxu0 0
      %373 = vmatpush1.bf16.msra.mxu0 0
      %374 = vmatprep.subr.bf16.mxu0 0
      %375 = vmatpush1.bf16.msra.mxu0 0
      %376 = vmatprep.mubr.bf16.mxu0 0
      %377 = vmatmul.mubr.bf16.gmra.mrb[0].mxu0 %v294
      %v378 = vpop.f32.mrb[0].mxu0
      %v379 = vadd.f32 %v288, %v378
      %v380 = vpop.f32.mrb[0].mxu0
      %v381 = vpop.f32.mrb[0].mxu0
      %v382 = vadd.f32 %v288, %v381
      %v383 = vpop.f32.mrb[0].mxu0
      %384 = vdwg.mxu0
      %vm385 = vcmask 64512
      %v386 = vsel %vm385, %v379, 0.0
      %387 = vadd.xlane.f32.xlu0 %v386
      %v388 = vpop.xlane.xlu0 %387
      %v389 = vsel %vm385, %v382, 0.0
      %390 = vadd.xlane.f32.xlu0 %v389
      %v391 = vpop.xlane.xlu0 %390
      %v392 = vmul.f32 %v379, %v379
      %v393 = vmul.f32 %v382, %v382
      %v394 = vsel %vm385, %v392, 0.0
      %395 = vadd.xlane.f32.xlu0 %v394
      %v396 = vpop.xlane.xlu0 %395
      %v397 = vsel %vm385, %v393, 0.0
      %398 = vadd.xlane.f32.xlu0 %v397
      %v399 = vpop.xlane.xlu0 %398
      %v400 = vmul.f32 %v388, 0.125
      %v401 = vmul.f32 %v391, 0.125
      %v402 = vmul.f32 %v396, 0.125
      %v403 = vmul.f32 %v399, 0.125
      %v404 = vmul.f32 %v400, %v400
      %v405 = vmul.f32 %v401, %v401
      %v406 = vsub.f32 %v402, %v404
      %v407 = vsub.f32 %v403, %v405
      %v408 = vsub.f32 %v379, %v400
      %v409 = vsub.f32 %v382, %v401
      %v410 = vadd.f32 %v406, 1e-05
      %v411 = vadd.f32 %v407, 1e-05
      %v412 = vrsqrt.pop %v410
      %v413 = vrsqrt.pop %v411
      %v414 = vmul.f32 %v408, %v412
      %v415 = vmul.f32 %v409, %v413
      %v416 = vld [vmem:[%s3] sm:$0x1]
      %v418 = vlaneseq
      %v419 = vshrl.u32 %v418, 7
      %v420 = vsub.s32 0, %v419
      %v421 = vrot.slane %v416, %v420
      %v423 = vmul.f32 %v414, %v421
      %v424 = vmul.f32 %v415, %v421
      %v425 = vld [vmem:[%s4] sm:$0x1]
      %v427 = vlaneseq
      %v428 = vshrl.u32 %v427, 7
      %v429 = vsub.s32 0, %v428
      %v430 = vrot.slane %v425, %v429
      %v432 = vadd.f32 %v423, %v430
      %v433 = vadd.f32 %v424, %v430
      %v434 = vmul.f32 %v432, 0.5
      %v435 = vmul.f32 %v433, 0.5
      %v436 = vmul.f32 %v432, 0.70710677
      %v437 = vmul.f32 %v433, 0.70710677
      %v438 = verf.f32.pop %v436
      %v439 = verf.f32.pop %v437
      %v440 = vadd.f32 %v438, 1.0
      %v441 = vadd.f32 %v439, 1.0
      %v442 = vmul.f32 %v434, %v440
      %v443 = vmul.f32 %v435, %v441
      %444 = vst.msk [vmem:[%s262] sm:$0xff] %vm385, %v442
      %445 = vst.msk [vmem:[%s262 + $0x8] sm:$0xff] %vm385, %v443
      %s446 = smul.u32 2, %s21
      %p447 = scmp.lt.s32.totalorder %s20, 1
      %s448 = scalar_select %p447, %s20, 1
      %p449 = scmp.lt.s32.totalorder %s446, 1
      %s450 = scalar_select %p449, %s446, 1
      %s451 = smul.addr %s448, 2
      %s452 = sadd.s32 %s450, %s451
      %s453 = smul.addr %s452, 8
      %s454 = scalar_lea.vmem %s5, %s453
      // Predicated region
      $region41: #{tpu_custom_call.1} parent=39 // pred_check
        %p455 = pneg %p160
      $region42: #{tpu_custom_call.1} parent=39 // pred_check_branch
        %457 = sbr.rel (%p455) target = $region44
      $region43: #{tpu_custom_call.1} parent=39 // pred_region
        %s458 = smul.u32 2, %s21
      $region44: #{tpu_custom_call.1} parent=39 // pred_fallthru
        _
    $region40: #{tpu_custom_call.1} parent=5 // pred_fallthru
      _
    %p459 = scmp.le.s32.totalorder 2, %s11
    // Predicated region
    $region45: #{tpu_custom_call.1} parent=5 // pred_check
      %p460 = pneg %p459
    $region46: #{tpu_custom_call.1} parent=5 // pred_check_branch
      %462 = sbr.rel (%p460) target = $region48
    $region47: #{tpu_custom_call.1} parent=5 // pred_region
      %s463 = ssub.s32 %s11, 2
      // Predicated region
      $region49: #{tpu_custom_call.1} parent=47 // pred_check
        %p464 = pneg %p166
      $region50: #{tpu_custom_call.1} parent=47 // pred_check_branch
        %466 = sbr.rel (%p464) target = $region52
      $region51: #{tpu_custom_call.1} parent=47 // pred_region
        %s467 = smul.u32 2, %s23
        %p468 = scmp.lt.s32.totalorder %s22, 1
        %s469 = scalar_select %p468, %s22, 1
        %p470 = scmp.lt.s32.totalorder %s467, 1
        %s471 = scalar_select %p470, %s467, 1
        %s472 = smul.addr %s469, 2
        %s473 = sadd.s32 %s471, %s472
        %s474 = smul.addr %s473, 8
        %s475 = scalar_lea.vmem %s5, %s474
      $region52: #{tpu_custom_call.1} parent=47 // pred_fallthru
        _
    $region48: #{tpu_custom_call.1} parent=5 // pred_fallthru
      _
  $region6: #{tpu_custom_call.1} parent=0 // loop_footer
    %s15 = sadd.s32 1, %s11
  $region7: #{tpu_custom_call.1} parent=0 // loop_footer_branch
    %10 = sbr.rel target = $region3
  $region8: #{tpu_custom_call.1} parent=0 // loop_exit
    _

</llo_original>
